<compile_context>
chip_gen: v7x
topology: tpu7x:2x2x1
jax: 0.10.0
libtpu: 0.0.40
codegen_flags: <defaults>
</compile_context>

<pallas_src>
import jax
import jax.numpy as jnp
from jax.experimental import pallas as pl
from jax.experimental.pallas import tpu as pltpu


def _round_up(x: int, m: int) -> int:
    return ((x + m - 1) // m) * m


def _cdiv(a: int, b: int) -> int:
    return (a + b - 1) // b


def _num_tensorcores_per_chip() -> int:
    """2 TCs on v4 / v5p / v7x style chips, 1 on v5e / v6e. Best-effort."""
    try:
        kind = jax.devices()[0].device_kind.lower()
    except Exception:
        return 1
    if ("v7" in kind) or ("tpu7" in kind) or ("v4" in kind) or ("v5p" in kind):
        return 2
    return 1


def _choose_tile(batch_rows: int, num_tc: int, max_tile: int) -> tuple[int, int]:
    """Return (TB, B_pad). Multi-tile grids use TB % 128 == 0 so the lane-dense
    (1, TB) output block satisfies the (8, 128) BlockSpec constraint."""
    b8 = _round_up(max(batch_rows, 1), 8)
    if num_tc > 1 and b8 > 128:
        # Even number of tiles so both TensorCores get equal work.
        n_tiles = num_tc * max(1, _cdiv(b8, num_tc * max_tile))
        tb = _round_up(_cdiv(b8, n_tiles), 128)
        b_pad = tb * n_tiles
    else:
        tb = min(b8, max_tile)
        if tb < b8:                      # multi-tile on a single TC
            tb = _round_up(tb, 128)
        b_pad = _round_up(b8, tb)
    return tb, b_pad


def _critic_kernel(x_ref, w1_ref, b1_ref, w2_ref, b2_ref, w3_ref, b3_ref, o_ref):
    # Layer 1: cast the f32 input to bf16 in-register at the MXU boundary.
    x = x_ref[...].astype(jnp.bfloat16)
    h1 = jnp.dot(x, w1_ref[...], preferred_element_type=jnp.float32)
    h1 = jnp.maximum(h1 + b1_ref[...], 0.0)

    # Layer 2: downcast activations to bf16 only at the MXU boundary.
    h2 = jnp.dot(h1.astype(jnp.bfloat16), w2_ref[...],
                 preferred_element_type=jnp.float32)
    h2 = jnp.maximum(h2 + b2_ref[...], 0.0)

    # Layer 3 (256 -> 1): VPU multiply, XLU transpose to move the batch onto
    # lanes, then a sublane reduce -> lane-dense (1, TB) row. The XLU/VPU work
    # rides in slack under the layer-2 MXU pass. Bias is a scalar from SMEM.
    h2w = h2 * w3_ref[...]                                     # (TB, F2) f32
    v = jnp.sum(jnp.transpose(h2w), axis=0, keepdims=True)     # (1, TB) f32
    o_ref[...] = (v + b3_ref[0, 0]).astype(o_ref.dtype)


def prepare_critic_params(params):
    """One-time conversion of f32 PyTorch-style params into kernel layout:
    bf16 matmul weights, (1, F) f32 biases, (1, F2) f32 w3 row, (1, 1) f32 b3."""
    w1, b1, w2, b2, w3, b3 = params
    return (
        w1.astype(jnp.bfloat16),                    # (D,  F1)
        b1.reshape(1, -1).astype(jnp.float32),      # (1,  F1)
        w2.astype(jnp.bfloat16),                    # (F1, F2)
        b2.reshape(1, -1).astype(jnp.float32),      # (1,  F2)
        w3.reshape(1, -1).astype(jnp.float32),      # (1,  F2)
        b3.reshape(1, 1).astype(jnp.float32),       # (1,  1)  -> SMEM scalar
    )


def critic_forward(state, kparams, *, max_tile: int = 1024):
    """state: (B, input_dims) f32, kparams from prepare_critic_params -> (B, 1) f32."""
    w1b, b1r, w2b, b2r, w3r, b3s = kparams
    B, D = state.shape
    F1 = w1b.shape[1]
    F2 = w2b.shape[1]
    assert w1b.shape[0] == D, "state feature dim does not match W1"

    num_tc = _num_tensorcores_per_chip()
    TB, B_pad = _choose_tile(B, num_tc, max_tile)

    x = state
    if B_pad != B:
        x = jnp.pad(x, ((0, B_pad - B), (0, 0)))

    out = pl.pallas_call(
        _critic_kernel,
        out_shape=jax.ShapeDtypeStruct((1, B_pad), jnp.float32),
        grid=(B_pad // TB,),
        in_specs=[
            pl.BlockSpec((TB, D), lambda i: (i, 0)),             # x: batch-tiled, f32
            pl.BlockSpec((D, F1), lambda i: (0, 0)),             # W1: VMEM-resident
            pl.BlockSpec((1, F1), lambda i: (0, 0)),             # b1
            pl.BlockSpec((F1, F2), lambda i: (0, 0)),            # W2: VMEM-resident
            pl.BlockSpec((1, F2), lambda i: (0, 0)),             # b2
            pl.BlockSpec((1, F2), lambda i: (0, 0)),             # w3 row
            pl.BlockSpec(memory_space=pltpu.MemorySpace.SMEM),   # b3 scalar
        ],
        out_specs=pl.BlockSpec((1, TB), lambda i: (0, i)),       # lane-dense row
        compiler_params=pltpu.CompilerParams(
            dimension_semantics=("parallel",)),
    )(x, w1b, b1r, w2b, b2r, w3r, b3s)

    return out[0, :B].reshape(B, 1)


def init_critic_params(key, input_dims, fc1_dims=256, fc2_dims=256):
    """Deterministic init matching PyTorch nn.Linear default:
    U(-1/sqrt(fan_in), 1/sqrt(fan_in)). Weights stored as (fan_in, fan_out)."""
    def linear(key, fan_in, fan_out):
        kw, kb = jax.random.split(key)
        bound = 1.0 / jnp.sqrt(jnp.float32(fan_in))
        w = jax.random.uniform(kw, (fan_in, fan_out), jnp.float32, -bound, bound)
        b = jax.random.uniform(kb, (fan_out,), jnp.float32, -bound, bound)
        return w, b

    k1, k2, k3 = jax.random.split(key, 3)
    w1, b1 = linear(k1, input_dims, fc1_dims)
    w2, b2 = linear(k2, fc1_dims, fc2_dims)
    w3, b3 = linear(k3, fc2_dims, 1)
    return (w1, b1, w2, b2, w3, b3)


def critic_forward_ref(state, params):
    """Pure-JAX reference mirroring the kernel's bf16-matmul / f32-accumulate numerics."""
    w1, b1, w2, b2, w3, b3 = params
    xb = state.astype(jnp.bfloat16)
    h1 = jnp.maximum(
        jnp.dot(xb, w1.astype(jnp.bfloat16), preferred_element_type=jnp.float32) + b1, 0.0)
    h2 = jnp.maximum(
        jnp.dot(h1.astype(jnp.bfloat16), w2.astype(jnp.bfloat16),
                preferred_element_type=jnp.float32) + b2, 0.0)
    return jnp.sum(h2 * w3.reshape(1, -1), axis=-1, keepdims=True) + b3.reshape(1, 1)


if __name__ == "__main__":
    key = jax.random.PRNGKey(0)
    k_param, k_state, k_state2 = jax.random.split(key, 3)

    batch = 8
    input_dims = 32  # e.g. a flat observation vector
    params = init_critic_params(k_param, input_dims, fc1_dims=256, fc2_dims=256)
    kparams = prepare_critic_params(params)   # one-time weight conversion
    state = jax.random.normal(k_state, (batch, input_dims), jnp.float32)

    critic_fn = jax.jit(critic_forward)
    value = jax.block_until_ready(critic_fn(state, kparams))
    ref = critic_forward_ref(state, params)
    assert value.shape == (batch, 1)
    assert jnp.allclose(value, ref, atol=1e-2, rtol=1e-2), "mismatch vs reference (small batch)"

    # Exercise the multi-tile grid path (grid > 1, padded batch, resident weights,
    # lane-dense (1, TB) output blocks with TB % 128 == 0).
    batch_big = 300
    state_big = jax.random.normal(k_state2, (batch_big, input_dims), jnp.float32)
    value_big = jax.block_until_ready(critic_forward(state_big, kparams, max_tile=128))
    ref_big = critic_forward_ref(state_big, params)
    assert value_big.shape == (batch_big, 1)
    assert jnp.allclose(value_big, ref_big, atol=1e-2, rtol=1e-2), "mismatch vs reference (gridded)"

    print("KERNEL_OK")
</pallas_src>

<mosaic_0001>
module attributes {stable_mosaic.version = 11 : i64} {
  func.func @_critic_kernel(%arg0: i32, %arg1: memref<8x32xf32, #tpu.memory_space<vmem>>, %arg2: memref<32x256xbf16, #tpu.memory_space<vmem>>, %arg3: memref<1x256xf32, #tpu.memory_space<vmem>>, %arg4: memref<256x256xbf16, #tpu.memory_space<vmem>>, %arg5: memref<1x256xf32, #tpu.memory_space<vmem>>, %arg6: memref<1x256xf32, #tpu.memory_space<vmem>>, %arg7: memref<1x1xf32, #tpu.memory_space<smem>>, %arg8: memref<1x8xf32, #tpu.memory_space<vmem>>) attributes {dimension_semantics = [#tpu.dimension_semantics<parallel>], iteration_bounds = array<i64: 1>, scalar_prefetch = 0 : i64, scratch_operands = 0 : i64, tpu.core_type = #tpu.core_type<tc>, window_params = [{transform_indices = @transform_0, window_bounds = array<i64: 8, 32>}, {pipeline_mode = #tpu.pipeline_mode<synchronous>, transform_indices = @transform_1, window_bounds = array<i64: 32, 256>}, {pipeline_mode = #tpu.pipeline_mode<synchronous>, transform_indices = @transform_2, window_bounds = array<i64: 1, 256>}, {pipeline_mode = #tpu.pipeline_mode<synchronous>, transform_indices = @transform_3, window_bounds = array<i64: 256, 256>}, {pipeline_mode = #tpu.pipeline_mode<synchronous>, transform_indices = @transform_4, window_bounds = array<i64: 1, 256>}, {pipeline_mode = #tpu.pipeline_mode<synchronous>, transform_indices = @transform_5, window_bounds = array<i64: 1, 256>}, {transform_indices = @transform_6, window_bounds = array<i64: 1, 1>}, {transform_indices = @transform_7, window_bounds = array<i64: 1, 8>}]} {
    %c0 = arith.constant 0 : index
    %c0_0 = arith.constant 0 : index
    %0 = vector.load %arg1[%c0, %c0_0] : memref<8x32xf32, #tpu.memory_space<vmem>>, vector<8x32xf32>
    %1 = arith.truncf %0 : vector<8x32xf32> to vector<8x32xbf16>
    %c0_1 = arith.constant 0 : index
    %c0_2 = arith.constant 0 : index
    %2 = vector.load %arg2[%c0_1, %c0_2] : memref<32x256xbf16, #tpu.memory_space<vmem>>, vector<32x256xbf16>
    %cst = arith.constant dense<0.000000e+00> : vector<8x256xf32>
    %3 = tpu.matmul %1, %2, %cst {dimension_numbers = #tpu.dot_dimension_numbers<[1], [0], [0], [1], [0, 0, 1, 1], [], []>} : vector<8x32xbf16>, vector<32x256xbf16>, vector<8x256xf32> -> vector<8x256xf32>
    %c0_3 = arith.constant 0 : index
    %c0_4 = arith.constant 0 : index
    %4 = vector.load %arg3[%c0_3, %c0_4] : memref<1x256xf32, #tpu.memory_space<vmem>>, vector<1x256xf32>
    %5 = vector.broadcast %4 : vector<1x256xf32> to vector<8x256xf32>
    %6 = arith.addf %3, %5 : vector<8x256xf32>
    %cst_5 = arith.constant 0.000000e+00 : f32
    %7 = vector.broadcast %cst_5 : f32 to vector<8x256xf32>
    %8 = arith.maximumf %6, %7 : vector<8x256xf32>
    %9 = arith.truncf %8 : vector<8x256xf32> to vector<8x256xbf16>
    %c0_6 = arith.constant 0 : index
    %c0_7 = arith.constant 0 : index
    %10 = vector.load %arg4[%c0_6, %c0_7] : memref<256x256xbf16, #tpu.memory_space<vmem>>, vector<256x256xbf16>
    %cst_8 = arith.constant dense<0.000000e+00> : vector<8x256xf32>
    %11 = tpu.matmul %9, %10, %cst_8 {dimension_numbers = #tpu.dot_dimension_numbers<[1], [0], [0], [1], [0, 0, 1, 1], [], []>} : vector<8x256xbf16>, vector<256x256xbf16>, vector<8x256xf32> -> vector<8x256xf32>
    %c0_9 = arith.constant 0 : index
    %c0_10 = arith.constant 0 : index
    %12 = vector.load %arg5[%c0_9, %c0_10] : memref<1x256xf32, #tpu.memory_space<vmem>>, vector<1x256xf32>
    %13 = vector.broadcast %12 : vector<1x256xf32> to vector<8x256xf32>
    %14 = arith.addf %11, %13 : vector<8x256xf32>
    %cst_11 = arith.constant 0.000000e+00 : f32
    %15 = vector.broadcast %cst_11 : f32 to vector<8x256xf32>
    %16 = arith.maximumf %14, %15 : vector<8x256xf32>
    %c0_12 = arith.constant 0 : index
    %c0_13 = arith.constant 0 : index
    %17 = vector.load %arg6[%c0_12, %c0_13] : memref<1x256xf32, #tpu.memory_space<vmem>>, vector<1x256xf32>
    %18 = vector.broadcast %17 : vector<1x256xf32> to vector<8x256xf32>
    %19 = arith.mulf %16, %18 : vector<8x256xf32>
    %20 = tpu.transpose %19, [1, 0] : vector<8x256xf32> -> vector<256x8xf32>
    %cst_14 = arith.constant dense<0.000000e+00> : vector<8xf32>
    %21 = vector.multi_reduction <add>, %20, %cst_14 [0] : vector<256x8xf32> to vector<8xf32>
    %22 = vector.shape_cast %21 : vector<8xf32> to vector<1x8xf32>
    %c0_15 = arith.constant 0 : index
    %c0_16 = arith.constant 0 : index
    %23 = memref.load %arg7[%c0_15, %c0_16] : memref<1x1xf32, #tpu.memory_space<smem>>
    %24 = vector.broadcast %23 : f32 to vector<1x8xf32>
    %25 = arith.addf %22, %24 : vector<1x8xf32>
    %c0_17 = arith.constant 0 : index
    %c0_18 = arith.constant 0 : index
    %26 = vector.load %arg8[%c0_17, %c0_18] : memref<1x8xf32, #tpu.memory_space<vmem>>, vector<1x8xf32>
    tpu.vector_store %arg8[%c0_17, %c0_18], %25 {strides = array<i32>} : memref<1x8xf32, #tpu.memory_space<vmem>>, vector<1x8xf32>,
    return
  }
  func.func @transform_0(%arg0: i32) -> (i32, i32) {
    %c0_i32 = arith.constant 0 : i32
    %c0_i32_0 = arith.constant 0 : i32
    return %arg0, %c0_i32 : i32, i32
  }
  func.func @transform_1(%arg0: i32) -> (i32, i32) {
    %c0_i32 = arith.constant 0 : i32
    %c0_i32_0 = arith.constant 0 : i32
    %c0_i32_1 = arith.constant 0 : i32
    return %c0_i32, %c0_i32_0 : i32, i32
  }
  func.func @transform_2(%arg0: i32) -> (i32, i32) {
    %c0_i32 = arith.constant 0 : i32
    %c0_i32_0 = arith.constant 0 : i32
    %c0_i32_1 = arith.constant 0 : i32
    return %c0_i32, %c0_i32_0 : i32, i32
  }
  func.func @transform_3(%arg0: i32) -> (i32, i32) {
    %c0_i32 = arith.constant 0 : i32
    %c0_i32_0 = arith.constant 0 : i32
    %c0_i32_1 = arith.constant 0 : i32
    return %c0_i32, %c0_i32_0 : i32, i32
  }
  func.func @transform_4(%arg0: i32) -> (i32, i32) {
    %c0_i32 = arith.constant 0 : i32
    %c0_i32_0 = arith.constant 0 : i32
    %c0_i32_1 = arith.constant 0 : i32
    return %c0_i32, %c0_i32_0 : i32, i32
  }
  func.func @transform_5(%arg0: i32) -> (i32, i32) {
    %c0_i32 = arith.constant 0 : i32
    %c0_i32_0 = arith.constant 0 : i32
    %c0_i32_1 = arith.constant 0 : i32
    return %c0_i32, %c0_i32_0 : i32, i32
  }
  func.func @transform_6(%arg0: i32) -> (i32, i32) {
    %c0_i32 = arith.constant 0 : i32
    %c0_i32_0 = arith.constant 0 : i32
    %c0_i32_1 = arith.constant 0 : i32
    return %c0_i32, %c0_i32_0 : i32, i32
  }
  func.func @transform_7(%arg0: i32) -> (i32, i32) {
    %c0_i32 = arith.constant 0 : i32
    %c0_i32_0 = arith.constant 0 : i32
    return %c0_i32, %arg0 : i32, i32
  }
}

</mosaic_0001>

<llo_original>
// kernel: critic_forward.1
$region0: #{critic_forward.1}
  #allocation0 [shape = 'u32[]', space=smem, size = 0x4, offset = 0x4, fixed_abs, tag = 'smem constant byte address 0x4 - core index']
  #allocation1 [shape = 'u32[144,128]{1,0:T(1,128)}', space=vmem, size = 0x12000, scoped, tag = 'internal scratch']
  #allocation2 [shape = 'f32[1,1]{1,0:T(1,128)S(6)}', space=smem, size = 0x200, scoped, tag = 'scoped memory for critic_forward.1']
  %s0 = inlined_call_operand.hbm [shape: f32[8,32], index: 0, kind: input, shape index: {}]
  %s1 = inlined_call_operand.hbm [shape: bf16[32,256], index: 1, kind: input, shape index: {}]
  %s2 = inlined_call_operand.vmem [shape: f32[1,256], index: 2, kind: input, shape index: {}]
  %s3 = inlined_call_operand.hbm [shape: bf16[256,256], index: 3, kind: input, shape index: {}]
  %s4 = inlined_call_operand.vmem [shape: f32[1,256], index: 4, kind: input, shape index: {}]
  %s5 = inlined_call_operand.vmem [shape: f32[1,256], index: 5, kind: input, shape index: {}]
  %s6 = inlined_call_operand.<no memory space> [shape: f32[1,1], index: 6, kind: input, shape index: {}]
  %s7 = inlined_call_operand.hbm [shape: f32[1,8], index: 7, kind: output, shape index: {}]
  %s8 = sld [smem:[#allocation0]]
  $region50: #{critic_forward.1} parent=0
    _
  %s10 = ssub.s32 1, %s8
  %s11 = scalar_select 0, %s10, %s8
  %12 = sst [smem:[#allocation2]] %s6
  $region1: #{critic_forward.1} parent=0
    #allocation3 [shape = 'u8[4096]{0}', space=vmem, size = 0x1000, scoped, tag = 'input window, operand 0, single buffered']
    #allocation4 [shape = 's32[1]{0}', space=sflag, size = 0x4, scoped, tag = 'scoped memory for critic_forward.1']
    #allocation5 [shape = 's32[1]{0}', space=sflag, size = 0x4, scoped, tag = 'scoped memory for critic_forward.1']
    #allocation6 [shape = 'u8[16384]{0}', space=vmem, size = 0x4000, scoped, tag = 'input window, operand 1, single buffered']
    #allocation7 [shape = 's32[1]{0}', space=sflag, size = 0x4, scoped, tag = 'scoped memory for critic_forward.1']
    #allocation8 [shape = 'u8[131072]{0}', space=vmem, size = 0x20000, scoped, tag = 'input window, operand 3, single buffered']
    #allocation9 [shape = 'u8[512]{0}', space=vmem, size = 0x400, scoped, tag = 'output window, operand 0, single buffered']
    %13 = vsyncpa [#allocation4], 0
    %14 = vsyncpa [#allocation7], 0
    %15 = vsyncpa [#allocation5], 0
    // Predicated region
    $region2: #{critic_forward.1} parent=1 // pred_check
      _
    $region3: #{critic_forward.1} parent=1 // pred_check_branch
      %17 = sbr.rel (0) target = $region5
    $region4: #{critic_forward.1} parent=1 // pred_region
      %s19 = ssub.s32 128, 128
      %20 = vsyncadd [#allocation4], %s19
      %s22 = sshll.u32 [#allocation3], 4
      %s23 = int_to_ptr.vmem [resolvable:$true] %s22
      %25 = dma.hbm_to_vmem [thread:$0]  %s0, 128, %s23, [#allocation4]
    $region5: #{critic_forward.1} parent=1 // pred_fallthru
      _
    // Predicated region
    $region6: #{critic_forward.1} parent=1 // pred_check
      _
    $region7: #{critic_forward.1} parent=1 // pred_check_branch
      %27 = sbr.rel (0) target = $region9
    $region8: #{critic_forward.1} parent=1 // pred_region
      %s29 = ssub.s32 512, 512
      %30 = vsyncadd [#allocation7], %s29
      %s31 = sshll.u32 [#allocation6], 4
      %s32 = int_to_ptr.vmem [resolvable:$true] %s31
      %37 = dma.hbm_to_vmem [thread:$0]  %s1, 512, %s32, [#allocation7], 128, 128, 8
    $region9: #{critic_forward.1} parent=1 // pred_fallthru
      _
    // Predicated region
    $region10: #{critic_forward.1} parent=1 // pred_check
      _
    $region11: #{critic_forward.1} parent=1 // pred_check_branch
      %39 = sbr.rel (0) target = $region13
    $region12: #{critic_forward.1} parent=1 // pred_region
      _
    $region13: #{critic_forward.1} parent=1 // pred_fallthru
      _
    // Predicated region
    $region14: #{critic_forward.1} parent=1 // pred_check
      _
    $region15: #{critic_forward.1} parent=1 // pred_check_branch
      %41 = sbr.rel (0) target = $region17
    $region16: #{critic_forward.1} parent=1 // pred_region
      %s43 = ssub.s32 4096, 4096
      %44 = vsyncadd [#allocation7], %s43
      %s45 = sshll.u32 [#allocation8], 4
      %s46 = int_to_ptr.vmem [resolvable:$true] %s45
      %51 = dma.hbm_to_vmem [thread:$0]  %s3, 4096, %s46, [#allocation7], 128, 128, 8
    $region17: #{critic_forward.1} parent=1 // pred_fallthru
      _
    // Predicated region
    $region18: #{critic_forward.1} parent=1 // pred_check
      _
    $region19: #{critic_forward.1} parent=1 // pred_check_branch
      %53 = sbr.rel (0) target = $region21
    $region20: #{critic_forward.1} parent=1 // pred_region
      _
    $region21: #{critic_forward.1} parent=1 // pred_fallthru
      _
    // Predicated region
    $region22: #{critic_forward.1} parent=1 // pred_check
      _
    $region23: #{critic_forward.1} parent=1 // pred_check_branch
      %55 = sbr.rel (0) target = $region25
    $region24: #{critic_forward.1} parent=1 // pred_region
      _
    $region25: #{critic_forward.1} parent=1 // pred_fallthru
      _
    // Predicated region
    $region26: #{critic_forward.1} parent=1 // pred_check
      _
    $region27: #{critic_forward.1} parent=1 // pred_check_branch
      %57 = sbr.rel (0) target = $region29
    $region28: #{critic_forward.1} parent=1 // pred_region
      _
    $region29: #{critic_forward.1} parent=1 // pred_fallthru
      _
    // Predicated region
    $region30: #{critic_forward.1} parent=1 // pred_check
      _
    $region31: #{critic_forward.1} parent=1 // pred_check_branch
      %59 = sbr.rel (0) target = $region33
    $region32: #{critic_forward.1} parent=1 // pred_region
      %60 = dma.done [#allocation4], 128
    $region33: #{critic_forward.1} parent=1 // pred_fallthru
      _
    // Predicated region
    $region34: #{critic_forward.1} parent=1 // pred_check
      _
    $region35: #{critic_forward.1} parent=1 // pred_check_branch
      %62 = sbr.rel (0) target = $region37
    $region36: #{critic_forward.1} parent=1 // pred_region
      %63 = dma.done [#allocation7], 512
    $region37: #{critic_forward.1} parent=1 // pred_fallthru
      _
    // Predicated region
    $region38: #{critic_forward.1} parent=1 // pred_check
      _
    $region39: #{critic_forward.1} parent=1 // pred_check_branch
      %65 = sbr.rel (0) target = $region41
    $region40: #{critic_forward.1} parent=1 // pred_region
      %66 = dma.done [#allocation7], 4096
    $region41: #{critic_forward.1} parent=1 // pred_fallthru
      _
    %v68 = vld [vmem:[#allocation3] sm:$0xff]
    %v69 = vpack.c.bf16 %v68, %v68
    %v70 = vld [vmem:[#allocation6] sm:$0xff]
    %v71 = vld [vmem:[#allocation6 + $0x8] sm:$0xff]
    %v72 = vld [vmem:[#allocation6 + $0x10] sm:$0xff]
    %v73 = vld [vmem:[#allocation6 + $0x18] sm:$0xff]
    %v74 = vld [vmem:[%s2] sm:$0x3]
    %v76 = vlaneseq
    %v77 = vshrl.u32 %v76, 7
    %v78 = vsub.s32 0, %v77
    %v79 = vrot.slane %v74, %v78
    %v80 = vlaneseq
    %v81 = vshrl.u32 %v80, 7
    %v82 = vsub.s32 1, %v81
    %v83 = vrot.slane %v74, %v82
    %v90 = vunpack.c.l.b16 %v70
    %v91 = vunpack.c.h.b16 %v70
    %v92 = vunpack.c.l.b16 %v71
    %v93 = vunpack.c.h.b16 %v71
    %v94 = vunpack.c.l.b16 %v72
    %v95 = vunpack.c.h.b16 %v72
    %v96 = vunpack.c.l.b16 %v73
    %v97 = vunpack.c.h.b16 %v73
    %v98 = vpack.c.b16 %v92, %v90
    %v99 = vpack.c.b16 %v93, %v91
    %v100 = vpack.c.b16 %v96, %v94
    %v101 = vpack.c.b16 %v97, %v95
    %vm106 = vcmask 261120
    %v108 = vsel %vm106, %v69, 0
    %110 = vmatprep.subr.bf16.mxu0 %v99
    %111 = vmatpush1.bf16.msra.mxu0 %v98
    %112 = vmatprep.subr.bf16.mxu0 %v101
    %113 = vmatpush1.bf16.msra.mxu0 %v100
    %114 = vmatprep.subr.bf16.mxu0 0
    %115 = vmatpush1.bf16.msra.mxu0 0
    %116 = vmatprep.subr.bf16.mxu0 0
    %117 = vmatpush1.bf16.msra.mxu0 0
    %118 = vmatprep.subr.bf16.mxu0 0
    %119 = vmatpush1.bf16.msra.mxu0 0
    %120 = vmatprep.subr.bf16.mxu0 0
    %121 = vmatpush1.bf16.msra.mxu0 0
    %122 = vmatprep.subr.bf16.mxu0 0
    %123 = vmatpush1.bf16.msra.mxu0 0
    %124 = vmatprep.subr.bf16.mxu0 0
    %125 = vmatpush1.bf16.msra.mxu0 0
    %126 = vmatprep.subr.bf16.mxu0 0
    %127 = vmatpush1.bf16.msra.mxu0 0
    %128 = vmatprep.subr.bf16.mxu0 0
    %129 = vmatpush1.bf16.msra.mxu0 0
    %130 = vmatprep.subr.bf16.mxu0 0
    %131 = vmatpush1.bf16.msra.mxu0 0
    %132 = vmatprep.subr.bf16.mxu0 0
    %133 = vmatpush1.bf16.msra.mxu0 0
    %134 = vmatprep.subr.bf16.mxu0 0
    %135 = vmatpush1.bf16.msra.mxu0 0
    %136 = vmatprep.subr.bf16.mxu0 0
    %137 = vmatpush1.bf16.msra.mxu0 0
    %138 = vmatprep.subr.bf16.mxu0 0
    %139 = vmatpush1.bf16.msra.mxu0 0
    %140 = vmatprep.subr.bf16.mxu0 0
    %141 = vmatpush1.bf16.msra.mxu0 0
    %142 = vmatprep.mubr.bf16.mxu0 0
    %143 = vmatmul.mubr.bf16.gmra.mrb[0].mxu0 %v108
    %v144 = vpop.f32.mrb[0].mxu0
    %v145 = vadd.f32 %v79, %v144
    %v146 = vpop.f32.mrb[0].mxu0
    %v147 = vadd.f32 %v83, %v146
    %v148 = vpop.f32.mrb[0].mxu0
    %v149 = vpop.f32.mrb[0].mxu0
    %150 = vdwg.mxu0
    %v151 = vmax.f32 %v145, 0.0
    %v152 = vmax.f32 %v147, 0.0
    %v153 = vpack.c.bf16 %v151, %v151
    %v154 = vpack.c.bf16 %v152, %v152
    %v155 = vld [vmem:[#allocation8] sm:$0xff]
    %v156 = vld [vmem:[#allocation8 + $0x8] sm:$0xff]
    %v157 = vld [vmem:[#allocation8 + $0x10] sm:$0xff]
    %v158 = vld [vmem:[#allocation8 + $0x18] sm:$0xff]
    %v159 = vld [vmem:[#allocation8 + $0x20] sm:$0xff]
    %v160 = vld [vmem:[#allocation8 + $0x28] sm:$0xff]
    %v161 = vld [vmem:[#allocation8 + $0x30] sm:$0xff]
    %v162 = vld [vmem:[#allocation8 + $0x38] sm:$0xff]
    %v163 = vld [vmem:[#allocation8 + $0x40] sm:$0xff]
    %v164 = vld [vmem:[#allocation8 + $0x48] sm:$0xff]
    %v165 = vld [vmem:[#allocation8 + $0x50] sm:$0xff]
    %v166 = vld [vmem:[#allocation8 + $0x58] sm:$0xff]
    %v167 = vld [vmem:[#allocation8 + $0x60] sm:$0xff]
    %v168 = vld [vmem:[#allocation8 + $0x68] sm:$0xff]
    %v169 = vld [vmem:[#allocation8 + $0x70] sm:$0xff]
    %v170 = vld [vmem:[#allocation8 + $0x78] sm:$0xff]
    %v171 = vld [vmem:[#allocation8 + $0x80] sm:$0xff]
    %v172 = vld [vmem:[#allocation8 + $0x88] sm:$0xff]
    %v173 = vld [vmem:[#allocation8 + $0x90] sm:$0xff]
    %v174 = vld [vmem:[#allocation8 + $0x98] sm:$0xff]
    %v175 = vld [vmem:[#allocation8 + $0xa0] sm:$0xff]
    %v176 = vld [vmem:[#allocation8 + $0xa8] sm:$0xff]
    %v177 = vld [vmem:[#allocation8 + $0xb0] sm:$0xff]
    %v178 = vld [vmem:[#allocation8 + $0xb8] sm:$0xff]
    %v179 = vld [vmem:[#allocation8 + $0xc0] sm:$0xff]
    %v180 = vld [vmem:[#allocation8 + $0xc8] sm:$0xff]
    %v181 = vld [vmem:[#allocation8 + $0xd0] sm:$0xff]
    %v182 = vld [vmem:[#allocation8 + $0xd8] sm:$0xff]
    %v183 = vld [vmem:[#allocation8 + $0xe0] sm:$0xff]
    %v184 = vld [vmem:[#allocation8 + $0xe8] sm:$0xff]
    %v185 = vld [vmem:[#allocation8 + $0xf0] sm:$0xff]
    %v186 = vld [vmem:[#allocation8 + $0xf8] sm:$0xff]
    %v187 = vld [vmem:[%s4] sm:$0x3]
    %v189 = vlaneseq
    %v190 = vshrl.u32 %v189, 7
    %v191 = vsub.s32 0, %v190
    %v192 = vrot.slane %v187, %v191
    %v193 = vlaneseq
    %v194 = vshrl.u32 %v193, 7
    %v195 = vsub.s32 1, %v194
    %v196 = vrot.slane %v187, %v195
    %v231 = vunpack.c.l.b16 %v155
    %v232 = vunpack.c.h.b16 %v155
    %v233 = vunpack.c.l.b16 %v156
    %v234 = vunpack.c.h.b16 %v156
    %v235 = vunpack.c.l.b16 %v157
    %v236 = vunpack.c.h.b16 %v157
    %v237 = vunpack.c.l.b16 %v158
    %v238 = vunpack.c.h.b16 %v158
    %v239 = vunpack.c.l.b16 %v159
    %v240 = vunpack.c.h.b16 %v159
    %v241 = vunpack.c.l.b16 %v160
    %v242 = vunpack.c.h.b16 %v160
    %v243 = vunpack.c.l.b16 %v161
    %v244 = vunpack.c.h.b16 %v161
    %v245 = vunpack.c.l.b16 %v162
    %v246 = vunpack.c.h.b16 %v162
    %v247 = vunpack.c.l.b16 %v163
    %v248 = vunpack.c.h.b16 %v163
    %v249 = vunpack.c.l.b16 %v164
    %v250 = vunpack.c.h.b16 %v164
    %v251 = vunpack.c.l.b16 %v165
    %v252 = vunpack.c.h.b16 %v165
    %v253 = vunpack.c.l.b16 %v166
    %v254 = vunpack.c.h.b16 %v166
    %v255 = vunpack.c.l.b16 %v167
    %v256 = vunpack.c.h.b16 %v167
    %v257 = vunpack.c.l.b16 %v168
    %v258 = vunpack.c.h.b16 %v168
    %v259 = vunpack.c.l.b16 %v169
    %v260 = vunpack.c.h.b16 %v169
    %v261 = vunpack.c.l.b16 %v170
    %v262 = vunpack.c.h.b16 %v170
    %v263 = vunpack.c.l.b16 %v171
    %v264 = vunpack.c.h.b16 %v171
    %v265 = vunpack.c.l.b16 %v172
    %v266 = vunpack.c.h.b16 %v172
    %v267 = vunpack.c.l.b16 %v173
    %v268 = vunpack.c.h.b16 %v173
    %v269 = vunpack.c.l.b16 %v174
    %v270 = vunpack.c.h.b16 %v174
    %v271 = vunpack.c.l.b16 %v175
    %v272 = vunpack.c.h.b16 %v175
    %v273 = vunpack.c.l.b16 %v176
    %v274 = vunpack.c.h.b16 %v176
    %v275 = vunpack.c.l.b16 %v177
    %v276 = vunpack.c.h.b16 %v177
    %v277 = vunpack.c.l.b16 %v178
    %v278 = vunpack.c.h.b16 %v178
    %v279 = vunpack.c.l.b16 %v179
    %v280 = vunpack.c.h.b16 %v179
    %v281 = vunpack.c.l.b16 %v180
    %v282 = vunpack.c.h.b16 %v180
    %v283 = vunpack.c.l.b16 %v181
    %v284 = vunpack.c.h.b16 %v181
    %v285 = vunpack.c.l.b16 %v182
    %v286 = vunpack.c.h.b16 %v182
    %v287 = vunpack.c.l.b16 %v183
    %v288 = vunpack.c.h.b16 %v183
    %v289 = vunpack.c.l.b16 %v184
    %v290 = vunpack.c.h.b16 %v184
    %v291 = vunpack.c.l.b16 %v185
    %v292 = vunpack.c.h.b16 %v185
    %v293 = vunpack.c.l.b16 %v186
    %v294 = vunpack.c.h.b16 %v186
    %v295 = vpack.c.b16 %v233, %v231
    %v296 = vpack.c.b16 %v234, %v232
    %v297 = vpack.c.b16 %v237, %v235
    %v298 = vpack.c.b16 %v238, %v236
    %v299 = vpack.c.b16 %v241, %v239
    %v300 = vpack.c.b16 %v242, %v240
    %v301 = vpack.c.b16 %v245, %v243
    %v302 = vpack.c.b16 %v246, %v244
    %v303 = vpack.c.b16 %v249, %v247
    %v304 = vpack.c.b16 %v250, %v248
    %v305 = vpack.c.b16 %v253, %v251
    %v306 = vpack.c.b16 %v254, %v252
    %v307 = vpack.c.b16 %v257, %v255
    %v308 = vpack.c.b16 %v258, %v256
    %v309 = vpack.c.b16 %v261, %v259
    %v310 = vpack.c.b16 %v262, %v260
    %v311 = vpack.c.b16 %v265, %v263
    %v312 = vpack.c.b16 %v266, %v264
    %v313 = vpack.c.b16 %v269, %v267
    %v314 = vpack.c.b16 %v270, %v268
    %v315 = vpack.c.b16 %v273, %v271
    %v316 = vpack.c.b16 %v274, %v272
    %v317 = vpack.c.b16 %v277, %v275
    %v318 = vpack.c.b16 %v278, %v276
    %v319 = vpack.c.b16 %v281, %v279
    %v320 = vpack.c.b16 %v282, %v280
    %v321 = vpack.c.b16 %v285, %v283
    %v322 = vpack.c.b16 %v286, %v284
    %v323 = vpack.c.b16 %v289, %v287
    %v324 = vpack.c.b16 %v290, %v288
    %v325 = vpack.c.b16 %v293, %v291
    %v326 = vpack.c.b16 %v294, %v292
    %359 = vmatprep.subr.bf16.mxu0 %v296
    %360 = vmatpush1.bf16.msra.mxu0 %v295
    %361 = vmatprep.subr.bf16.mxu0 %v298
    %362 = vmatpush1.bf16.msra.mxu0 %v297
    %363 = vmatprep.subr.bf16.mxu0 %v300
    %364 = vmatpush1.bf16.msra.mxu0 %v299
    %365 = vmatprep.subr.bf16.mxu0 %v302
    %366 = vmatpush1.bf16.msra.mxu0 %v301
    %367 = vmatprep.subr.bf16.mxu0 %v304
    %368 = vmatpush1.bf16.msra.mxu0 %v303
    %369 = vmatprep.subr.bf16.mxu0 %v306
    %370 = vmatpush1.bf16.msra.mxu0 %v305
    %371 = vmatprep.subr.bf16.mxu0 %v308
    %372 = vmatpush1.bf16.msra.mxu0 %v307
    %373 = vmatprep.subr.bf16.mxu0 %v310
    %374 = vmatpush1.bf16.msra.mxu0 %v309
    %375 = vmatprep.subr.bf16.mxu0 %v312
    %376 = vmatpush1.bf16.msra.mxu0 %v311
    %377 = vmatprep.subr.bf16.mxu0 %v314
    %378 = vmatpush1.bf16.msra.mxu0 %v313
    %379 = vmatprep.subr.bf16.mxu0 %v316
    %380 = vmatpush1.bf16.msra.mxu0 %v315
    %381 = vmatprep.subr.bf16.mxu0 %v318
    %382 = vmatpush1.bf16.msra.mxu0 %v317
    %383 = vmatprep.subr.bf16.mxu0 %v320
    %384 = vmatpush1.bf16.msra.mxu0 %v319
    %385 = vmatprep.subr.bf16.mxu0 %v322
    %386 = vmatpush1.bf16.msra.mxu0 %v321
    %387 = vmatprep.subr.bf16.mxu0 %v324
    %388 = vmatpush1.bf16.msra.mxu0 %v323
    %389 = vmatprep.subr.bf16.mxu0 %v326
    %390 = vmatpush1.bf16.msra.mxu0 %v325
    %391 = vmatprep.mubr.bf16.mxu0 %v154
    %392 = vmatmul.mubr.bf16.gmra.mrb[0].mxu0 %v153
    %v393 = vpop.f32.mrb[0].mxu0
    %v394 = vadd.f32 %v192, %v393
    %v395 = vpop.f32.mrb[0].mxu0
    %v396 = vadd.f32 %v196, %v395
    %v397 = vpop.f32.mrb[0].mxu0
    %v398 = vpop.f32.mrb[0].mxu0
    %399 = vdwg.mxu0
    %v400 = vmax.f32 %v394, 0.0
    %v401 = vmax.f32 %v396, 0.0
    %v402 = vld [vmem:[%s5] sm:$0x3]
    %v404 = vlaneseq
    %v405 = vshrl.u32 %v404, 7
    %v406 = vsub.s32 0, %v405
    %v407 = vrot.slane %v402, %v406
    %v408 = vlaneseq
    %v409 = vshrl.u32 %v408, 7
    %v410 = vsub.s32 1, %v409
    %v411 = vrot.slane %v402, %v410
    %v414 = vmul.f32 %v400, %v407
    %v415 = vmul.f32 %v401, %v411
    %416 = vxpose.xlu0.b32.start [1/16] %v414, 128
    %417 = vxpose.xlu0.b32.cont [2/16] 0.0, 128
    %418 = vxpose.xlu0.b32.cont [3/16] 0.0, 128
    %419 = vxpose.xlu0.b32.cont [4/16] 0.0, 128
    %420 = vxpose.xlu0.b32.cont [5/16] 0.0, 128
    %421 = vxpose.xlu0.b32.cont [6/16] 0.0, 128
    %422 = vxpose.xlu0.b32.cont [7/16] 0.0, 128
    %423 = vxpose.xlu0.b32.cont [8/16] 0.0, 128
    %424 = vxpose.xlu0.b32.cont [9/16] 0.0, 128
    %425 = vxpose.xlu0.b32.cont [10/16] 0.0, 128
    %426 = vxpose.xlu0.b32.cont [11/16] 0.0, 128
    %427 = vxpose.xlu0.b32.cont [12/16] 0.0, 128
    %428 = vxpose.xlu0.b32.cont [13/16] 0.0, 128
    %429 = vxpose.xlu0.b32.cont [14/16] 0.0, 128
    %430 = vxpose.xlu0.b32.cont [15/16] 0.0, 128
    %431 = vxpose.xlu0.b32.end [16/16] 0.0, 128
    %v432 = vpop.trf.xlu0
    %v433 = vpop.trf.xlu0
    %v434 = vpop.trf.xlu0
    %v435 = vpop.trf.xlu0
    %v436 = vpop.trf.xlu0
    %v437 = vpop.trf.xlu0
    %v438 = vpop.trf.xlu0
    %v439 = vpop.trf.xlu0
    %v440 = vpop.trf.xlu0
    %v441 = vpop.trf.xlu0
    %v442 = vpop.trf.xlu0
    %v443 = vpop.trf.xlu0
    %v444 = vpop.trf.xlu0
    %v445 = vpop.trf.xlu0
    %v446 = vpop.trf.xlu0
    %v447 = vpop.trf.xlu0
    %448 = vxpose.xlu0.b32.start [1/16] %v415, 128
    %449 = vxpose.xlu0.b32.cont [2/16] 0.0, 128
    %450 = vxpose.xlu0.b32.cont [3/16] 0.0, 128
    %451 = vxpose.xlu0.b32.cont [4/16] 0.0, 128
    %452 = vxpose.xlu0.b32.cont [5/16] 0.0, 128
    %453 = vxpose.xlu0.b32.cont [6/16] 0.0, 128
    %454 = vxpose.xlu0.b32.cont [7/16] 0.0, 128
    %455 = vxpose.xlu0.b32.cont [8/16] 0.0, 128
    %456 = vxpose.xlu0.b32.cont [9/16] 0.0, 128
    %457 = vxpose.xlu0.b32.cont [10/16] 0.0, 128
    %458 = vxpose.xlu0.b32.cont [11/16] 0.0, 128
    %459 = vxpose.xlu0.b32.cont [12/16] 0.0, 128
    %460 = vxpose.xlu0.b32.cont [13/16] 0.0, 128
    %461 = vxpose.xlu0.b32.cont [14/16] 0.0, 128
    %462 = vxpose.xlu0.b32.cont [15/16] 0.0, 128
    %463 = vxpose.xlu0.b32.end [16/16] 0.0, 128
    %v464 = vpop.trf.xlu0
    %v465 = vpop.trf.xlu0
    %v466 = vpop.trf.xlu0
    %v467 = vpop.trf.xlu0
    %v468 = vpop.trf.xlu0
    %v469 = vpop.trf.xlu0
    %v470 = vpop.trf.xlu0
    %v471 = vpop.trf.xlu0
    %v472 = vpop.trf.xlu0
    %v473 = vpop.trf.xlu0
    %v474 = vpop.trf.xlu0
    %v475 = vpop.trf.xlu0
    %v476 = vpop.trf.xlu0
    %v477 = vpop.trf.xlu0
    %v478 = vpop.trf.xlu0
    %v479 = vpop.trf.xlu0
    %vm480 = vcmask 64512
    %v481 = vsel %vm480, %v432, 0.0
    %v482 = vsel %vm480, %v433, 0.0
    %v483 = vadd.f32 %v481, %v482
    %v484 = vsel %vm480, %v434, 0.0
    %v485 = vadd.f32 %v483, %v484
    %v486 = vsel %vm480, %v435, 0.0
    %v487 = vadd.f32 %v485, %v486
    %v488 = vsel %vm480, %v436, 0.0
    %v489 = vadd.f32 %v487, %v488
    %v490 = vsel %vm480, %v437, 0.0
    %v491 = vadd.f32 %v489, %v490
    %v492 = vsel %vm480, %v438, 0.0
    %v493 = vadd.f32 %v491, %v492
    %v494 = vsel %vm480, %v439, 0.0
    %v495 = vadd.f32 %v493, %v494
    %v496 = vsel %vm480, %v440, 0.0
    %v497 = vadd.f32 %v495, %v496
    %v498 = vsel %vm480, %v441, 0.0
    %v499 = vadd.f32 %v497, %v498
    %v500 = vsel %vm480, %v442, 0.0
    %v501 = vadd.f32 %v499, %v500
    %v502 = vsel %vm480, %v443, 0.0
    %v503 = vadd.f32 %v501, %v502
    %v504 = vsel %vm480, %v444, 0.0
    %v505 = vadd.f32 %v503, %v504
    %v506 = vsel %vm480, %v445, 0.0
    %v507 = vadd.f32 %v505, %v506
    %v508 = vsel %vm480, %v446, 0.0
    %v509 = vadd.f32 %v507, %v508
    %v510 = vsel %vm480, %v447, 0.0
    %v511 = vadd.f32 %v509, %v510
    %v512 = vsel %vm480, %v464, 0.0
    %v513 = vadd.f32 %v511, %v512
    %v514 = vsel %vm480, %v465, 0.0
    %v515 = vadd.f32 %v513, %v514
    %v516 = vsel %vm480, %v466, 0.0
    %v517 = vadd.f32 %v515, %v516
    %v518 = vsel %vm480, %v467, 0.0
    %v519 = vadd.f32 %v517, %v518
    %v520 = vsel %vm480, %v468, 0.0
    %v521 = vadd.f32 %v519, %v520
    %v522 = vsel %vm480, %v469, 0.0
    %v523 = vadd.f32 %v521, %v522
    %v524 = vsel %vm480, %v470, 0.0
    %v525 = vadd.f32 %v523, %v524
    %v526 = vsel %vm480, %v471, 0.0
    %v527 = vadd.f32 %v525, %v526
    %v528 = vsel %vm480, %v472, 0.0
    %v529 = vadd.f32 %v527, %v528
    %v530 = vsel %vm480, %v473, 0.0
    %v531 = vadd.f32 %v529, %v530
    %v532 = vsel %vm480, %v474, 0.0
    %v533 = vadd.f32 %v531, %v532
    %v534 = vsel %vm480, %v475, 0.0
    %v535 = vadd.f32 %v533, %v534
    %v536 = vsel %vm480, %v476, 0.0
    %v537 = vadd.f32 %v535, %v536
    %v538 = vsel %vm480, %v477, 0.0
    %v539 = vadd.f32 %v537, %v538
    %v540 = vsel %vm480, %v478, 0.0
    %v541 = vadd.f32 %v539, %v540
    %v542 = vsel %vm480, %v479, 0.0
    %v543 = vadd.f32 %v541, %v542
    %v544 = vrot.slane %v543, 4
    %v545 = vadd.f32 %v543, %v544
    %v546 = vrot.slane %v545, 2
    %v547 = vadd.f32 %v545, %v546
    %v548 = vrot.slane %v547, 1
    %v549 = vadd.f32 %v547, %v548
    %s550 = sld [smem:[#allocation2]]
    %v551 = vstv %s550
    %v552 = vadd.f32 %v549, %v551
    %vm553 = vcmask 57344
    %554 = vst.msk [vmem:[#allocation9] sm:$0x1] %vm553, %v552
    // Predicated region
    $region42: #{critic_forward.1} parent=1 // pred_check
      _
    $region43: #{critic_forward.1} parent=1 // pred_check_branch
      %556 = sbr.rel (0) target = $region45
    $region44: #{critic_forward.1} parent=1 // pred_region
      %s558 = ssub.s32 16, 16
      %559 = vsyncadd [#allocation5], %s558
      %s561 = sshll.u32 [#allocation9], 4
      %s562 = int_to_ptr.vmem [resolvable:$true] %s561
      %564 = dma.vmem_to_hbm [thread:$0]  %s562, 16, %s7, [#allocation5]
    $region45: #{critic_forward.1} parent=1 // pred_fallthru
      _
    // Predicated region
    $region46: #{critic_forward.1} parent=1 // pred_check
      _
    $region47: #{critic_forward.1} parent=1 // pred_check_branch
      %566 = sbr.rel (0) target = $region49
    $region48: #{critic_forward.1} parent=1 // pred_region
      %567 = dma.done [#allocation5], 16
    $region49: #{critic_forward.1} parent=1 // pred_fallthru
      _
    %568 = vsyncpa [#allocation4], 1
    %569 = vsyncpa [#allocation7], 1
    %570 = vsyncpa [#allocation5], 1

</llo_original>
